<compile_context>
chip_gen: v5e
topology: v5e:2x2
jax: 0.10.0
libtpu: 0.0.40
codegen_flags: <defaults>
</compile_context>

<pallas_src>
import functools

import jax
import jax.numpy as jnp
from jax import lax
from jax.experimental import pallas as pl
from jax.experimental.pallas import tpu as pltpu

EPS = 1e-5


# ---------------------------------------------------------------------------
# Kernel 1: per-(batch, channel) mean and 1/std of content (tiled over space).
# ---------------------------------------------------------------------------
def _content_stats_kernel(ct_ref, mean_ref, rstd_ref, s1_ref, s2_ref, *, n_total):
    k = pl.program_id(1)

    @pl.when(k == 0)
    def _():
        s1_ref[...] = jnp.zeros_like(s1_ref)
        s2_ref[...] = jnp.zeros_like(s2_ref)

    x = ct_ref[0]                                            # (C, tile)
    s1_ref[...] += jnp.sum(x, axis=-1, keepdims=True)
    s2_ref[...] += jnp.sum(x * x, axis=-1, keepdims=True)

    @pl.when(k == pl.num_programs(1) - 1)
    def _():
        n = float(n_total)
        mean = s1_ref[...] * (1.0 / n)
        var = (s2_ref[...] - n * mean * mean) * (1.0 / (n - 1.0))   # unbiased (ddof=1)
        mean_ref[0] = mean
        rstd_ref[0] = lax.rsqrt(var + EPS)                          # 1/sqrt(var + eps)


def _content_stats(ct_flat, tile):
    B, C, Nc = ct_flat.shape
    kernel = functools.partial(_content_stats_kernel, n_total=Nc)
    return pl.pallas_call(
        kernel,
        out_shape=(jax.ShapeDtypeStruct((B, C, 1), jnp.float32),
                   jax.ShapeDtypeStruct((B, C, 1), jnp.float32)),
        grid_spec=pltpu.PrefetchScalarGridSpec(
            num_scalar_prefetch=0,
            grid=(B, Nc // tile),
            in_specs=[pl.BlockSpec((1, C, tile), lambda b, k: (b, 0, k))],
            out_specs=(pl.BlockSpec((1, C, 1), lambda b, k: (b, 0, 0)),
                       pl.BlockSpec((1, C, 1), lambda b, k: (b, 0, 0))),
            scratch_shapes=[pltpu.VMEM((C, 1), jnp.float32),
                            pltpu.VMEM((C, 1), jnp.float32)]),
        compiler_params=pltpu.CompilerParams(
            dimension_semantics=("parallel", "arbitrary")),
    )(ct_flat)


# ---------------------------------------------------------------------------
# Kernel 2: the attention + AdaIN, tiled over query (content) positions.
# ---------------------------------------------------------------------------
def _attn_adain_kernel(ck_ref, ct_ref, sk_ref, st_ref, cmean_ref, crstd_ref,
                       wf_ref, bf_ref, wg_ref, bg_ref, wh_ref, bh_ref,
                       out_ref, g_s, hh_s, *, mxu_dtype):
    C = ct_ref.shape[1]
    Ns = st_ref.shape[2]
    q = pl.program_id(1)

    # --- per-batch style-side prep, hoisted: runs only for the first query
    #     tile of each batch; q axis is "arbitrary" so scratch stays valid. ---
    @pl.when(q == 0)
    def _():
        g = jnp.dot(wg_ref[...], sk_ref[0],
                    preferred_element_type=jnp.float32) + bg_ref[...]    # (Ck, Ns)
        h = jnp.dot(wh_ref[...], st_ref[0],
                    preferred_element_type=jnp.float32) + bh_ref[...]    # (C, Ns)
        g_s[...] = g.astype(g_s.dtype)
        hh_s[0:C, :] = h.astype(hh_s.dtype)
        hh_s[C:2 * C, :] = (h * h).astype(hh_s.dtype)
        # Row of ones: its matmul output row is exactly the softmax denominator.
        hh_s[2 * C:2 * C + 1, :] = jnp.ones((1, Ns), hh_s.dtype)

    # --- per-query-tile attention ---
    f = jnp.dot(wf_ref[...], ck_ref[0],
                preferred_element_type=jnp.float32) + bf_ref[...]        # (Ck, tq)

    # scores: contract the channel axis -> (tq, Ns)
    s = lax.dot_general(f.astype(mxu_dtype), g_s[...],
                        (((0,), (0,)), ((), ())),
                        preferred_element_type=jnp.float32)
    s = s - jnp.max(s, axis=-1, keepdims=True)
    p = jnp.exp(s)                                   # unnormalized softmax in (0, 1]

    # fused attention-weighted sums: [H; H*H; 1] @ P^T -> (2C + 1, tq)
    a = lax.dot_general(hh_s[...], p.astype(mxu_dtype),
                        (((1,), (1,)), ((), ())),
                        preferred_element_type=jnp.float32)
    use_approx = jnp.dtype(mxu_dtype) != jnp.dtype(jnp.float32)
    inv = pl.reciprocal(a[2 * C:2 * C + 1, :], approx=use_approx)        # (1, tq)
    a_mean = a[0:C, :] * inv                                             # E[H]
    a_ex2 = a[C:2 * C, :] * inv                                          # E[H^2]
    a_std = jnp.sqrt(jnp.maximum(a_ex2 - a_mean * a_mean, 0.0))          # relu + sqrt

    # mean_variance_norm(content) using the precomputed per-(b, c) stats.
    normed = (ct_ref[0] - cmean_ref[0]) * crstd_ref[0]                   # (C, tq)
    out_ref[0] = (a_std * normed + a_mean).astype(out_ref.dtype)


def _vmem_bytes_estimate(C, Ck, Ns, tq, mxu_itemsize):
    f32 = 4
    style_inputs = 2 * (Ck + C) * Ns * f32             # sk / st blocks (double-buffered)
    scratch = (Ck + 2 * C + 1) * Ns * mxu_itemsize     # G and [H; H*H; 1]
    q_tiles = 2 * (Ck + 2 * C) * tq * f32              # ck / ct / out tiles (double-buffered)
    scores = 3 * tq * Ns * f32                         # scores + exp + cast temporaries
    return style_inputs + scratch + q_tiles + scores


def attn_adain(content, style, content_key, style_key, params, *,
               q_tile=None, mxu_dtype=jnp.float32, max_sample=256 * 256):
    """content/style*: NCHW float32 arrays. params = (wf, bf, wg, bg, wh, bh)."""
    B, C, Hc, Wc = content.shape
    _, Ck, _, _ = content_key.shape
    _, _, Hs, Ws = style.shape
    Nc, Ns = Hc * Wc, Hs * Ws

    # TODO(synk): the torch.randperm style-subsampling branch (w_g*h_g > max_sample)
    # is not implemented; this kernel requires Ns <= max_sample.
    assert Ns <= max_sample, "style subsampling (randperm) branch not implemented"

    # Channel-first flatten: NCHW -> (B, C, H*W).  Pure reshape, no transposes.
    ct = content.reshape(B, C, Nc)
    st = style.reshape(B, C, Ns)
    ck = content_key.reshape(B, Ck, Nc)
    sk = style_key.reshape(B, Ck, Ns)

    wf, bf, wg, bg, wh, bh = params
    wf2 = wf.reshape(Ck, Ck)       # (out, in): channel-first conv1x1 == W @ X + b
    wg2 = wg.reshape(Ck, Ck)
    wh2 = wh.reshape(C, C)
    bf2 = bf.reshape(Ck, 1)
    bg2 = bg.reshape(Ck, 1)
    bh2 = bh.reshape(C, 1)

    # Query-tile size: the largest lane-aligned tile whose working set fits a
    # conservative VMEM budget (sized for v7x's 64 MiB; v5e/v6e have 128 MiB).
    mxu_itemsize = jnp.dtype(mxu_dtype).itemsize
    budget = 40 * 2 ** 20
    if q_tile is None:
        q_tile = Nc
        for t in (1024, 512, 256, 128):
            if Nc % t == 0 and _vmem_bytes_estimate(C, Ck, Ns, t, mxu_itemsize) <= budget:
                q_tile = t
                break
    if Nc % q_tile != 0:
        # TODO(synk): pad Nc up to a multiple of 128 and mask instead of falling
        # back to one full-size tile.
        q_tile = Nc
    # TODO(synk): for very large Ns also tile the style axis with an
    # online-softmax (flash-attention style) accumulator.

    vmem_limit = int(min(48 * 2 ** 20,
                         max(16 * 2 ** 20,
                             2 * _vmem_bytes_estimate(C, Ck, Ns, q_tile, mxu_itemsize))))

    c_mean, c_rstd = _content_stats(ct, q_tile)

    kernel = functools.partial(_attn_adain_kernel, mxu_dtype=mxu_dtype)
    out_flat = pl.pallas_call(
        kernel,
        out_shape=jax.ShapeDtypeStruct((B, C, Nc), jnp.float32),
        grid_spec=pltpu.PrefetchScalarGridSpec(
            num_scalar_prefetch=0,
            grid=(B, Nc // q_tile),
            in_specs=[
                pl.BlockSpec((1, Ck, q_tile), lambda b, q: (b, 0, q)),   # content_key
                pl.BlockSpec((1, C, q_tile), lambda b, q: (b, 0, q)),    # content
                pl.BlockSpec((1, Ck, Ns), lambda b, q: (b, 0, 0)),       # style_key
                pl.BlockSpec((1, C, Ns), lambda b, q: (b, 0, 0)),        # style
                pl.BlockSpec((1, C, 1), lambda b, q: (b, 0, 0)),         # content mean
                pl.BlockSpec((1, C, 1), lambda b, q: (b, 0, 0)),         # content 1/std
                pl.BlockSpec((Ck, Ck), lambda b, q: (0, 0)),             # Wf
                pl.BlockSpec((Ck, 1), lambda b, q: (0, 0)),              # bf
                pl.BlockSpec((Ck, Ck), lambda b, q: (0, 0)),             # Wg
                pl.BlockSpec((Ck, 1), lambda b, q: (0, 0)),              # bg
                pl.BlockSpec((C, C), lambda b, q: (0, 0)),               # Wh
                pl.BlockSpec((C, 1), lambda b, q: (0, 0)),               # bh
            ],
            # Lane-dense output: last dim q_tile (multiple of 128) -> unmasked stores.
            out_specs=pl.BlockSpec((1, C, q_tile), lambda b, q: (b, 0, q)),
            scratch_shapes=[
                pltpu.VMEM((Ck, Ns), mxu_dtype),           # G
                pltpu.VMEM((2 * C + 1, Ns), mxu_dtype),    # [H; H*H; 1]
            ]),
        # B is megacore-parallel; the query axis stays "arbitrary" so the
        # per-batch G / [H; H*H; 1] scratch (written at q == 0) stays valid.
        compiler_params=pltpu.CompilerParams(
            dimension_semantics=("parallel", "arbitrary"),
            vmem_limit_bytes=vmem_limit),
    )(ck, ct, sk, st, c_mean, c_rstd, wf2, bf2, wg2, bg2, wh2, bh2)

    return out_flat.reshape(B, C, Hc, Wc)


# ---------------------------------------------------------------------------
# Pure-JAX port of the PyTorch forward, for correctness checking.
# ---------------------------------------------------------------------------
def reference(content, style, content_key, style_key, params):
    wf, bf, wg, bg, wh, bh = params

    def conv1x1(x, w, b):
        w2 = w.reshape(w.shape[0], w.shape[1])
        return jnp.einsum('oi,bihw->bohw', w2, x) + b.reshape(1, -1, 1, 1)

    F = conv1x1(content_key, wf, bf)
    G = conv1x1(style_key, wg, bg)
    H = conv1x1(style, wh, bh)
    b, _, hg, wg_ = G.shape
    Gm = G.reshape(b, -1, hg * wg_)
    style_flat = H.reshape(b, -1, hg * wg_).transpose(0, 2, 1)
    b, _, h, w = F.shape
    Fm = F.reshape(b, -1, h * w).transpose(0, 2, 1)
    S = jax.nn.softmax(jnp.einsum('bqc,bck->bqk', Fm, Gm), axis=-1)
    mean = jnp.einsum('bqk,bkc->bqc', S, style_flat)
    std = jnp.sqrt(jax.nn.relu(
        jnp.einsum('bqk,bkc->bqc', S, style_flat ** 2) - mean ** 2))
    mean = mean.reshape(b, h, w, -1).transpose(0, 3, 1, 2)
    std = std.reshape(b, h, w, -1).transpose(0, 3, 1, 2)
    N, Cc, _, _ = content.shape
    flat = content.reshape(N, Cc, -1)
    cm = flat.mean(axis=2).reshape(N, Cc, 1, 1)
    cs = jnp.sqrt(flat.var(axis=2, ddof=1) + EPS).reshape(N, Cc, 1, 1)
    normed = (content - cm) / cs
    return std * normed + mean


if __name__ == "__main__":
    key = jax.random.PRNGKey(0)
    B = 2
    C = 8        # in_planes
    Ck = 8       # key_planes
    Hc = Wc = 16
    Hs = Ws = 16

    ks = jax.random.split(key, 10)
    content = jax.random.normal(ks[0], (B, C, Hc, Wc), jnp.float32)
    style = jax.random.normal(ks[1], (B, C, Hs, Ws), jnp.float32)
    content_key = jax.random.normal(ks[2], (B, Ck, Hc, Wc), jnp.float32)
    style_key = jax.random.normal(ks[3], (B, Ck, Hs, Ws), jnp.float32)

    scale = 0.1
    wf = scale * jax.random.normal(ks[4], (Ck, Ck, 1, 1), jnp.float32)
    bf = scale * jax.random.normal(ks[5], (Ck,), jnp.float32)
    wg = scale * jax.random.normal(ks[6], (Ck, Ck, 1, 1), jnp.float32)
    bg = scale * jax.random.normal(ks[7], (Ck,), jnp.float32)
    wh = scale * jax.random.normal(ks[8], (C, C, 1, 1), jnp.float32)
    bh = scale * jax.random.normal(ks[9], (C,), jnp.float32)
    params = (wf, bf, wg, bg, wh, bh)

    ref = reference(content, style, content_key, style_key, params)

    # f32 MXU path with an explicit small query tile (exercises the Nc-tiled
    # pipeline and the per-batch scratch hoisting, Nc/q_tile = 2).
    out = attn_adain(content, style, content_key, style_key, params, q_tile=128)
    out = jax.block_until_ready(out)
    assert out.shape == (B, C, Hc, Wc)
    err = float(jnp.max(jnp.abs(out - ref)))
    assert jnp.allclose(out, ref, atol=3e-4, rtol=3e-4), f"f32 max abs err {err}"

    # bf16-MXU path (v6e/v7x fast path), auto tile selection, looser tolerance.
    out_bf16 = attn_adain(content, style, content_key, style_key, params,
                          mxu_dtype=jnp.bfloat16)
    out_bf16 = jax.block_until_ready(out_bf16)
    err_bf = float(jnp.max(jnp.abs(out_bf16 - ref)))
    assert jnp.allclose(out_bf16, ref, atol=5e-2, rtol=5e-2), f"bf16 max abs err {err_bf}"

    print("KERNEL_OK")
</pallas_src>

<mosaic_0001>
module attributes {stable_mosaic.version = 11 : i64} {
  func.func @_content_stats_kernel(%arg0: i32, %arg1: i32, %arg2: memref<1x8x128xf32, #tpu.memory_space<vmem>>, %arg3: memref<1x8x1xf32, #tpu.memory_space<vmem>>, %arg4: memref<1x8x1xf32, #tpu.memory_space<vmem>>, %arg5: memref<8x1xf32, #tpu.memory_space<vmem>>, %arg6: memref<8x1xf32, #tpu.memory_space<vmem>>) attributes {dimension_semantics = [#tpu.dimension_semantics<parallel>, #tpu.dimension_semantics<arbitrary>], iteration_bounds = array<i64: 2, 2>, scalar_prefetch = 0 : i64, scratch_operands = 2 : i64, tpu.core_type = #tpu.core_type<tc>, window_params = [{transform_indices = @transform_0, window_bounds = array<i64: 1, 8, 128>}, {transform_indices = @transform_1, window_bounds = array<i64: 1, 8, 1>}, {transform_indices = @transform_2, window_bounds = array<i64: 1, 8, 1>}]} {
    %c0_i32 = arith.constant 0 : i32
    %0 = arith.cmpi eq, %arg1, %c0_i32 : i32
    %1 = arith.extui %0 : i1 to i32
    %c0_i32_0 = arith.constant 0 : i32
    %2 = arith.cmpi ne, %1, %c0_i32_0 : i32
    scf.if %2 {
      %cst_13 = arith.constant 0.000000e+00 : f32
      %19 = vector.broadcast %cst_13 : f32 to vector<8x1xf32>
      %c0_14 = arith.constant 0 : index
      %c0_15 = arith.constant 0 : index
      %20 = vector.load %arg5[%c0_14, %c0_15] : memref<8x1xf32, #tpu.memory_space<vmem>>, vector<8x1xf32>
      tpu.vector_store %arg5[%c0_14, %c0_15], %19 {strides = array<i32>} : memref<8x1xf32, #tpu.memory_space<vmem>>, vector<8x1xf32>,
      %cst_16 = arith.constant 0.000000e+00 : f32
      %21 = vector.broadcast %cst_16 : f32 to vector<8x1xf32>
      %c0_17 = arith.constant 0 : index
      %c0_18 = arith.constant 0 : index
      %22 = vector.load %arg6[%c0_17, %c0_18] : memref<8x1xf32, #tpu.memory_space<vmem>>, vector<8x1xf32>
      tpu.vector_store %arg6[%c0_17, %c0_18], %21 {strides = array<i32>} : memref<8x1xf32, #tpu.memory_space<vmem>>, vector<8x1xf32>,
    } else {
    }
    %c0 = arith.constant 0 : index
    %c0_1 = arith.constant 0 : index
    %c0_2 = arith.constant 0 : index
    %3 = vector.load %arg2[%c0, %c0_1, %c0_2] : memref<1x8x128xf32, #tpu.memory_space<vmem>>, vector<1x8x128xf32>
    %4 = vector.shape_cast %3 : vector<1x8x128xf32> to vector<8x128xf32>
    %c0_3 = arith.constant 0 : index
    %c0_4 = arith.constant 0 : index
    %5 = vector.load %arg5[%c0_3, %c0_4] : memref<8x1xf32, #tpu.memory_space<vmem>>, vector<8x1xf32>
    %cst = arith.constant dense<0.000000e+00> : vector<8xf32>
    %6 = vector.multi_reduction <add>, %4, %cst [1] : vector<8x128xf32> to vector<8xf32>
    %7 = vector.shape_cast %6 : vector<8xf32> to vector<8x1xf32>
    %8 = arith.addf %5, %7 : vector<8x1xf32>
    %c0_5 = arith.constant 0 : index
    %c0_6 = arith.constant 0 : index
    %9 = vector.load %arg5[%c0_5, %c0_6] : memref<8x1xf32, #tpu.memory_space<vmem>>, vector<8x1xf32>
    tpu.vector_store %arg5[%c0_5, %c0_6], %8 {strides = array<i32>} : memref<8x1xf32, #tpu.memory_space<vmem>>, vector<8x1xf32>,
    %c0_7 = arith.constant 0 : index
    %c0_8 = arith.constant 0 : index
    %10 = vector.load %arg6[%c0_7, %c0_8] : memref<8x1xf32, #tpu.memory_space<vmem>>, vector<8x1xf32>
    %11 = arith.mulf %4, %4 : vector<8x128xf32>
    %cst_9 = arith.constant dense<0.000000e+00> : vector<8xf32>
    %12 = vector.multi_reduction <add>, %11, %cst_9 [1] : vector<8x128xf32> to vector<8xf32>
    %13 = vector.shape_cast %12 : vector<8xf32> to vector<8x1xf32>
    %14 = arith.addf %10, %13 : vector<8x1xf32>
    %c0_10 = arith.constant 0 : index
    %c0_11 = arith.constant 0 : index
    %15 = vector.load %arg6[%c0_10, %c0_11] : memref<8x1xf32, #tpu.memory_space<vmem>>, vector<8x1xf32>
    tpu.vector_store %arg6[%c0_10, %c0_11], %14 {strides = array<i32>} : memref<8x1xf32, #tpu.memory_space<vmem>>, vector<8x1xf32>,
    %c1_i32 = arith.constant 1 : i32
    %16 = arith.cmpi eq, %arg1, %c1_i32 : i32
    %17 = arith.extui %16 : i1 to i32
    %c0_i32_12 = arith.constant 0 : i32
    %18 = arith.cmpi ne, %17, %c0_i32_12 : i32
    scf.if %18 {
      %c0_13 = arith.constant 0 : index
      %c0_14 = arith.constant 0 : index
      %19 = vector.load %arg5[%c0_13, %c0_14] : memref<8x1xf32, #tpu.memory_space<vmem>>, vector<8x1xf32>
      %cst_15 = arith.constant 3.906250e-03 : f32
      %20 = vector.broadcast %cst_15 : f32 to vector<8x1xf32>
      %21 = arith.mulf %19, %20 : vector<8x1xf32>
      %c0_16 = arith.constant 0 : index
      %c0_17 = arith.constant 0 : index
      %22 = vector.load %arg6[%c0_16, %c0_17] : memref<8x1xf32, #tpu.memory_space<vmem>>, vector<8x1xf32>
      %cst_18 = arith.constant 2.560000e+02 : f32
      %23 = vector.broadcast %cst_18 : f32 to vector<8x1xf32>
      %24 = arith.mulf %23, %21 : vector<8x1xf32>
      %25 = arith.mulf %24, %21 : vector<8x1xf32>
      %26 = arith.subf %22, %25 : vector<8x1xf32>
      %cst_19 = arith.constant 0.00392156886 : f32
      %27 = vector.broadcast %cst_19 : f32 to vector<8x1xf32>
      %28 = arith.mulf %26, %27 : vector<8x1xf32>
      %c0_20 = arith.constant 0 : index
      %c0_21 = arith.constant 0 : index
      %c0_22 = arith.constant 0 : index
      %29 = vector.load %arg3[%c0_20, %c0_21, %c0_22] : memref<1x8x1xf32, #tpu.memory_space<vmem>>, vector<1x8x1xf32>
      %30 = vector.shape_cast %29 : vector<1x8x1xf32> to vector<8x1xf32>
      %31 = vector.shape_cast %21 : vector<8x1xf32> to vector<1x8x1xf32>
      tpu.vector_store %arg3[%c0_20, %c0_21, %c0_22], %31 {strides = array<i32>} : memref<1x8x1xf32, #tpu.memory_space<vmem>>, vector<1x8x1xf32>,
      %cst_23 = arith.constant 9.99999974E-6 : f32
      %32 = vector.broadcast %cst_23 : f32 to vector<8x1xf32>
      %33 = arith.addf %28, %32 : vector<8x1xf32>
      %34 = math.rsqrt %33 : vector<8x1xf32>
      %c0_24 = arith.constant 0 : index
      %c0_25 = arith.constant 0 : index
      %c0_26 = arith.constant 0 : index
      %35 = vector.load %arg4[%c0_24, %c0_25, %c0_26] : memref<1x8x1xf32, #tpu.memory_space<vmem>>, vector<1x8x1xf32>
      %36 = vector.shape_cast %35 : vector<1x8x1xf32> to vector<8x1xf32>
      %37 = vector.shape_cast %34 : vector<8x1xf32> to vector<1x8x1xf32>
      tpu.vector_store %arg4[%c0_24, %c0_25, %c0_26], %37 {strides = array<i32>} : memref<1x8x1xf32, #tpu.memory_space<vmem>>, vector<1x8x1xf32>,
    } else {
    }
    return
  }
  func.func @transform_0(%arg0: i32, %arg1: i32) -> (i32, i32, i32) {
    %c0_i32 = arith.constant 0 : i32
    %c0_i32_0 = arith.constant 0 : i32
    return %arg0, %c0_i32, %arg1 : i32, i32, i32
  }
  func.func @transform_1(%arg0: i32, %arg1: i32) -> (i32, i32, i32) {
    %c0_i32 = arith.constant 0 : i32
    %c0_i32_0 = arith.constant 0 : i32
    %c0_i32_1 = arith.constant 0 : i32
    return %arg0, %c0_i32, %c0_i32_0 : i32, i32, i32
  }
  func.func @transform_2(%arg0: i32, %arg1: i32) -> (i32, i32, i32) {
    %c0_i32 = arith.constant 0 : i32
    %c0_i32_0 = arith.constant 0 : i32
    %c0_i32_1 = arith.constant 0 : i32
    return %arg0, %c0_i32, %c0_i32_0 : i32, i32, i32
  }
}

</mosaic_0001>

<llo_original>
// kernel: tpu_custom_call.1
$region0: #{tpu_custom_call.1}
  #allocation0 [shape = 'u32[]', space=smem, size = 0x4, offset = 0x4, fixed_abs, tag = 'smem constant byte address 0x4 - core index']
  #allocation1 [shape = 'u32[72,128]{1,0:T(1,128)}', space=vmem, size = 0x9000, scoped, tag = 'internal scratch']
  #allocation2 [shape = 'f32[8,1]{1,0:T(8,128)}', space=vmem, size = 0x1000, scoped, tag = 'scratch operand']
  #allocation3 [shape = 'f32[8,1]{1,0:T(8,128)}', space=vmem, size = 0x1000, scoped, tag = 'scratch operand']
  %s0 = inlined_call_operand.hbm [shape: f32[2,8,256], index: 0, kind: input, shape index: {}]
  %s1 = inlined_call_operand.vmem [shape: f32[2,8,1], index: 1, kind: output, shape index: {0}]
  %s2 = inlined_call_operand.vmem [shape: f32[2,8,1], index: 2, kind: output, shape index: {1}]
  %3 = xla_tuple %s1, %s2
  %s4 = sld [smem:[#allocation0]]
  $region57: #{tpu_custom_call.1} parent=0
    _
  %s6 = ssub.s32 1, %s4
  %s7 = scalar_select 0, %s6, %s4
  $region1: #{tpu_custom_call.1} parent=0
    #allocation4 [shape = 'u8[8192]{0}', space=vmem, size = 0x2000, scoped, tag = 'input window, operand 0']
    #allocation5 [shape = 's32[2]{0}', space=sflag, size = 0x8, scoped, tag = 'scoped memory for tpu_custom_call.1']
    %8 = vsyncpa [#allocation5], 0
    %s9 = scalar_lea.sflag [#allocation5], 1
    %10 = vsyncpa %s9, 0
    loop: start=0, step=1, limit=6
    $region2: #{tpu_custom_call.1} parent=1 // loop_pre_header
      _
    $region3: #{tpu_custom_call.1} parent=1 // loop_header
      %s12 = sphi 0, %s16
      %p13 = scmp.ge.s32.totalorder %s12, 6
      %s19 = sphi 0, %s31
      %s20 = sphi 0, %s27
      %s21 = sphi 0, %s19
      %s22 = sphi 0, %s20
      %s23 = sphi 0, %s21
      %s24 = sphi 0, %s22
      %s36 = sphi 0, %s38
      %s39 = sphi 0, %s36
      %s40 = sphi 0, %s39
      %s56 = sphi 0, %s40
      %s62 = sphi 0, %s64
      %s65 = sphi 0, %s62
      %s66 = sphi 0, %s65
      %s82 = sphi 0, %s66
      %s88 = sphi 0, %s90
      %s91 = sphi 0, %s88
      %s92 = sphi 0, %s91
      %s108 = sphi 0, %s92
    $region4: #{tpu_custom_call.1} parent=1 // loop_header_branch
      %15 = sbr.rel (%p13) target = $region8
    $region5: #{tpu_custom_call.1} parent=1 // loop_body
      %s17 = ssub.s32 %s12, 1
      %s18 = ssub.s32 %s12, 2
      %s25 = sadd.s32 1, %s20
      %p26 = scmp.ge.s32.totalorder %s25, 2
      %s27 = scalar_select %p26, 0, %s25
      %s28 = sadd.s32 1, %s19
      %s29 = scalar_select %p26, %s28, %s19
      %p30 = scmp.ge.s32.totalorder %s29, 2
      %s31 = scalar_select %p30, 0, %s29
      %s32 = ssub.s32 %s19, %s31
      %s33 = ssub.s32 %s20, %s27
      %s34 = sor.u32 %s32, %s33
      %p35 = scmp.eq.s32.totalorder %s34, 0
      %s37 = sadd.s32 %s36, 1
      %s38 = scalar_select %p35, %s36, %s37
      %p41 = pneg %p35
      %p42 = scmp.eq.s32.totalorder %s12, 3
      %p43 = por %p41, %p42
      %p44 = scmp.ne.s32.totalorder %s36, %s39
      %p45 = scmp.eq.s32.totalorder %s12, 0
      %p46 = por %p44, %p45
      %p47 = scmp.ne.s32.totalorder %s36, %s39
      %p48 = scmp.eq.s32.totalorder %s17, 3
      %p49 = por %p47, %p48
      %p50 = scmp.ne.s32.totalorder %s39, %s40
      %p51 = scmp.eq.s32.totalorder %s17, 0
      %p52 = por %p50, %p51
      %p53 = scmp.ne.s32.totalorder %s39, %s40
      %p54 = scmp.eq.s32.totalorder %s18, 3
      %p55 = por %p53, %p54
      %p57 = scmp.ne.s32.totalorder %s40, %s56
      %p58 = scmp.eq.s32.totalorder %s18, 0
      %p59 = por %p57, %p58
      %s60 = ssub.s32 %s19, %s31
      %p61 = scmp.eq.s32.totalorder %s60, 0
      %s63 = sadd.s32 %s62, 1
      %s64 = scalar_select %p61, %s62, %s63
      %p67 = pneg %p61
      %p68 = scmp.eq.s32.totalorder %s12, 3
      %p69 = por %p67, %p68
      %p70 = scmp.ne.s32.totalorder %s62, %s65
      %p71 = scmp.eq.s32.totalorder %s12, 0
      %p72 = por %p70, %p71
      %p73 = scmp.ne.s32.totalorder %s62, %s65
      %p74 = scmp.eq.s32.totalorder %s17, 3
      %p75 = por %p73, %p74
      %p76 = scmp.ne.s32.totalorder %s65, %s66
      %p77 = scmp.eq.s32.totalorder %s17, 0
      %p78 = por %p76, %p77
      %p79 = scmp.ne.s32.totalorder %s65, %s66
      %p80 = scmp.eq.s32.totalorder %s18, 3
      %p81 = por %p79, %p80
      %p83 = scmp.ne.s32.totalorder %s66, %s82
      %p84 = scmp.eq.s32.totalorder %s18, 0
      %p85 = por %p83, %p84
      %s86 = ssub.s32 %s19, %s31
      %p87 = scmp.eq.s32.totalorder %s86, 0
      %s89 = sadd.s32 %s88, 1
      %s90 = scalar_select %p87, %s88, %s89
      %p93 = pneg %p87
      %p94 = scmp.eq.s32.totalorder %s12, 3
      %p95 = por %p93, %p94
      %p96 = scmp.ne.s32.totalorder %s88, %s91
      %p97 = scmp.eq.s32.totalorder %s12, 0
      %p98 = por %p96, %p97
      %p99 = scmp.ne.s32.totalorder %s88, %s91
      %p100 = scmp.eq.s32.totalorder %s17, 3
      %p101 = por %p99, %p100
      %p102 = scmp.ne.s32.totalorder %s91, %s92
      %p103 = scmp.eq.s32.totalorder %s17, 0
      %p104 = por %p102, %p103
      %p105 = scmp.ne.s32.totalorder %s91, %s92
      %p106 = scmp.eq.s32.totalorder %s18, 3
      %p107 = por %p105, %p106
      %p109 = scmp.ne.s32.totalorder %s92, %s108
      %p110 = scmp.eq.s32.totalorder %s18, 0
      %p111 = por %p109, %p110
      %p112 = scmp.le.s32.totalorder 1, %s12
      %p113 = scmp.lt.s32.totalorder %s12, 5
      %p114 = pnand %p112, %p113
      %p115 = pneg %p114
      // Predicated region
      $region9: #{tpu_custom_call.1} parent=5 // pred_check
        _
      $region10: #{tpu_custom_call.1} parent=5 // pred_check_branch
        %117 = sbr.rel (%p114) target = $region12
      $region11: #{tpu_custom_call.1} parent=5 // pred_region
        %s118 = ssub.s32 %s12, 1
      $region12: #{tpu_custom_call.1} parent=5 // pred_fallthru
        _
      %p119 = scmp.lt.s32.totalorder %s12, 4
      // Predicated region
      $region13: #{tpu_custom_call.1} parent=5 // pred_check
        %p120 = pneg %p119
      $region14: #{tpu_custom_call.1} parent=5 // pred_check_branch
        %122 = sbr.rel (%p120) target = $region16
      $region15: #{tpu_custom_call.1} parent=5 // pred_region
        // Predicated region
        $region17: #{tpu_custom_call.1} parent=15 // pred_check
          %p123 = pneg %p46
        $region18: #{tpu_custom_call.1} parent=15 // pred_check_branch
          %125 = sbr.rel (%p123) target = $region20
        $region19: #{tpu_custom_call.1} parent=15 // pred_region
          %s126 = sand.u32 %s36, 1
          %s127 = scalar_lea.sflag [#allocation5], %s126
          %s128 = sand.u32 %s36, 1
          %s129 = smul.addr %s128, 8
          %s130 = scalar_lea.vmem [#allocation4], %s129
          %132 = vsyncadd %s127, 0
          %s133 = smul.addr %s19, 2
          %s134 = sadd.s32 %s20, %s133
          %s135 = smul.addr %s134, 8
          %s136 = scalar_lea.hbm %s0, %s135
          %s138 = sshll.u32 %s136, 4
          %s139 = int_to_ptr.hbm [resolvable:$true] %s138
          %s140 = sshll.u32 %s130, 4
          %s141 = int_to_ptr.vmem [resolvable:$true] %s140
          %143 = dma.hbm_to_vmem [thread:$0]  %s139, 128, %s141, %s127
        $region20: #{tpu_custom_call.1} parent=15 // pred_fallthru
          _
      $region16: #{tpu_custom_call.1} parent=5 // pred_fallthru
        _
      %p144 = scmp.le.s32.totalorder 1, %s12
      %p145 = scmp.lt.s32.totalorder %s12, 5
      %p146 = pnand %p144, %p145
      %p147 = pneg %p146
      // Predicated region
      $region21: #{tpu_custom_call.1} parent=5 // pred_check
        _
      $region22: #{tpu_custom_call.1} parent=5 // pred_check_branch
        %149 = sbr.rel (%p146) target = $region24
      $region23: #{tpu_custom_call.1} parent=5 // pred_region
        %s150 = ssub.s32 %s12, 1
        %s151 = sand.u32 %s39, 1
        %s152 = scalar_lea.sflag [#allocation5], %s151
        %s153 = sand.u32 %s39, 1
        %s154 = smul.addr %s153, 8
        %s155 = scalar_lea.vmem [#allocation4], %s154
        // Predicated region
        $region25: #{tpu_custom_call.1} parent=23 // pred_check
          %p156 = pneg %p52
        $region26: #{tpu_custom_call.1} parent=23 // pred_check_branch
          %158 = sbr.rel (%p156) target = $region28
        $region27: #{tpu_custom_call.1} parent=23 // pred_region
          %160 = dma.done %s152, 128
        $region28: #{tpu_custom_call.1} parent=23 // pred_fallthru
          _
        %s161 = sand.u32 %s39, 1
        %s162 = scalar_lea.sflag [#allocation5], %s161
        %s163 = sand.u32 %s39, 1
        %s164 = smul.addr %s163, 8
        %s165 = scalar_lea.vmem [#allocation4], %s164
        %p166 = pneg %p52
        %p167 = pneg %p49
        %p168 = pneg %p78
        %p169 = pneg %p75
        %p170 = scmp.lt.s32.totalorder %s21, 1
        %s171 = scalar_select %p170, %s21, 1
        %s172 = smul.addr %s171, 8
        %s173 = scalar_lea.vmem %s1, %s172
        %p174 = pneg %p104
        %p175 = pneg %p101
        %p176 = scmp.lt.s32.totalorder %s21, 1
        %s177 = scalar_select %p176, %s21, 1
        %s178 = smul.addr %s177, 8
        %s179 = scalar_lea.vmem %s2, %s178
        %p180 = scmp.lt.s32.totalorder %s21, 1
        %s181 = scalar_select %p180, %s21, 1
        %s182 = smul.addr %s181, 8
        %s183 = scalar_lea.vmem %s1, %s182
        %p184 = scmp.lt.s32.totalorder %s21, 1
        %s185 = scalar_select %p184, %s21, 1
        %s186 = smul.addr %s185, 8
        %s187 = scalar_lea.vmem %s2, %s186
        %p188 = scmp.eq.s32.totalorder %s22, 0
        // Predicated region
        $region29: #{tpu_custom_call.1} parent=23 // pred_check
          %p189 = pneg %p188
        $region30: #{tpu_custom_call.1} parent=23 // pred_check_branch
          %191 = sbr.rel (%p189) target = $region32
        $region31: #{tpu_custom_call.1} parent=23 // pred_region
          %vm192 = vcmask 7168
          %193 = vst.msk [vmem:[#allocation2] sm:$0xff] %vm192, 0.0
          %194 = vst.msk [vmem:[#allocation3] sm:$0xff] %vm192, 0.0
        $region32: #{tpu_custom_call.1} parent=23 // pred_fallthru
          _
        %v195 = vld [vmem:[%s155] sm:$0xff]
        %v196 = vld [vmem:[#allocation2] sm:$0xff]
        %197 = vadd.xlane.f32.xlu0 %v195
        %v198 = vpop.xlane.xlu0 %197
        %v199 = vadd.f32 %v196, %v198
        %vm200 = vcmask 7168
        %201 = vst.msk [vmem:[#allocation2] sm:$0xff] %vm200, %v199
        %v202 = vld [vmem:[#allocation3] sm:$0xff]
        %v203 = vmul.f32 %v195, %v195
        %204 = vadd.xlane.f32.xlu0 %v203
        %v205 = vpop.xlane.xlu0 %204
        %v206 = vadd.f32 %v202, %v205
        %207 = vst.msk [vmem:[#allocation3] sm:$0xff] %vm200, %v206
        %p208 = scmp.eq.s32.totalorder %s22, 1
        // Predicated region
        $region33: #{tpu_custom_call.1} parent=23 // pred_check
          %p209 = pneg %p208
        $region34: #{tpu_custom_call.1} parent=23 // pred_check_branch
          %211 = sbr.rel (%p209) target = $region36
        $region35: #{tpu_custom_call.1} parent=23 // pred_region
          %v212 = vld [vmem:[#allocation2] sm:$0xff]
          %v213 = vmul.f32 %v212, 0.00390625
          %v214 = vld [vmem:[#allocation3] sm:$0xff]
          %v215 = vmul.f32 %v213, 256.0
          %v216 = vmul.f32 %v215, %v213
          %v217 = vsub.f32 %v214, %v216
          %v218 = vmul.f32 %v217, 0.003921569
          %219 = vst.msk [vmem:[%s183] sm:$0xff] %vm200, %v213
          %v220 = vadd.f32 %v218, 1e-05
          %v221 = vrsqrt.pop %v220
          %v222 = vmul.f32 %v221, %v220
          %v223 = vmul.f32 %v222, %v221
          %v224 = vmul.f32 0.5, %v223
          %v225 = vsub.f32 1.5, %v224
          %v226 = vmul.f32 %v221, %v225
          %vm227 = vweird.f32 %v220
          %vm228 = vweird.f32 %v221
          %vm229 = vmor %vm227, %vm228
          %v230 = vsel %vm229, %v221, %v226
          %231 = vst.msk [vmem:[%s187] sm:$0xff] %vm200, %v230
        $region36: #{tpu_custom_call.1} parent=23 // pred_fallthru
          _
        %p232 = scmp.lt.s32.totalorder %s21, 1
        %s233 = scalar_select %p232, %s21, 1
        %s234 = smul.addr %s233, 8
        %s235 = scalar_lea.vmem %s1, %s234
        %p236 = scmp.lt.s32.totalorder %s21, 1
        %s237 = scalar_select %p236, %s21, 1
        %s238 = smul.addr %s237, 8
        %s239 = scalar_lea.vmem %s2, %s238
        // Predicated region
        $region37: #{tpu_custom_call.1} parent=23 // pred_check
          %p240 = pneg %p75
        $region38: #{tpu_custom_call.1} parent=23 // pred_check_branch
          %242 = sbr.rel (%p240) target = $region40
        $region39: #{tpu_custom_call.1} parent=23 // pred_region
          _
        $region40: #{tpu_custom_call.1} parent=23 // pred_fallthru
          _
        // Predicated region
        $region41: #{tpu_custom_call.1} parent=23 // pred_check
          %p243 = pneg %p101
        $region42: #{tpu_custom_call.1} parent=23 // pred_check_branch
          %245 = sbr.rel (%p243) target = $region44
        $region43: #{tpu_custom_call.1} parent=23 // pred_region
          _
        $region44: #{tpu_custom_call.1} parent=23 // pred_fallthru
          _
      $region24: #{tpu_custom_call.1} parent=5 // pred_fallthru
        _
      %p246 = scmp.le.s32.totalorder 2, %s12
      // Predicated region
      $region45: #{tpu_custom_call.1} parent=5 // pred_check
        %p247 = pneg %p246
      $region46: #{tpu_custom_call.1} parent=5 // pred_check_branch
        %249 = sbr.rel (%p247) target = $region48
      $region47: #{tpu_custom_call.1} parent=5 // pred_region
        %s250 = ssub.s32 %s12, 2
        // Predicated region
        $region49: #{tpu_custom_call.1} parent=47 // pred_check
          %p251 = pneg %p81
        $region50: #{tpu_custom_call.1} parent=47 // pred_check_branch
          %253 = sbr.rel (%p251) target = $region52
        $region51: #{tpu_custom_call.1} parent=47 // pred_region
          %p254 = scmp.lt.s32.totalorder %s23, 1
          %s255 = scalar_select %p254, %s23, 1
          %s256 = smul.addr %s255, 8
          %s257 = scalar_lea.vmem %s1, %s256
        $region52: #{tpu_custom_call.1} parent=47 // pred_fallthru
          _
        // Predicated region
        $region53: #{tpu_custom_call.1} parent=47 // pred_check
          %p258 = pneg %p107
        $region54: #{tpu_custom_call.1} parent=47 // pred_check_branch
          %260 = sbr.rel (%p258) target = $region56
        $region55: #{tpu_custom_call.1} parent=47 // pred_region
          %p261 = scmp.lt.s32.totalorder %s23, 1
          %s262 = scalar_select %p261, %s23, 1
          %s263 = smul.addr %s262, 8
          %s264 = scalar_lea.vmem %s2, %s263
        $region56: #{tpu_custom_call.1} parent=47 // pred_fallthru
          _
      $region48: #{tpu_custom_call.1} parent=5 // pred_fallthru
        _
    $region6: #{tpu_custom_call.1} parent=1 // loop_footer
      %s16 = sadd.s32 1, %s12
    $region7: #{tpu_custom_call.1} parent=1 // loop_footer_branch
      %11 = sbr.rel target = $region3
    $region8: #{tpu_custom_call.1} parent=1 // loop_exit
      _
    %265 = vsyncpa [#allocation5], 1
    %s266 = scalar_lea.sflag [#allocation5], 1
    %267 = vsyncpa %s266, 1

</llo_original>
